<compile_context>
chip_gen: v6e
topology: v6e:2x2x1
jax: 0.10.0
libtpu: 0.0.40
codegen_flags: <defaults>
</compile_context>

<pallas_src>
import functools
import math

import jax
import jax.numpy as jnp
from jax import lax
from jax.experimental import pallas as pl
from jax.experimental.pallas import tpu as pltpu


def _round_up(x: int, m: int) -> int:
    return ((x + m - 1) // m) * m


def _sinusoidal_kernel(time_ref, out_ref, *, half_dim: int, neg_scale: float,
                       tile_b: int, full_column: bool):
    dim = 2 * half_dim
    if full_column:
        # Whole time column is VMEM-resident (constant index_map); slice the
        # window for this grid step in-kernel.
        start = pl.multiple_of(pl.program_id(0) * tile_b, tile_b)
        t = time_ref[pl.ds(start, tile_b), :]                       # (tile_b, 1)
    else:
        t = time_ref[...]                                           # (tile_b, 1)

    # Full-width lane index; second half repeats the frequency table and
    # selects cos instead of sin -> one unmasked, lane-dense store.
    lane = lax.broadcasted_iota(jnp.int32, (1, dim), 1)              # (1, dim)
    is_cos = lane >= half_dim
    freq_idx = (lane - jnp.where(is_cos, half_dim, 0)).astype(jnp.float32)
    freqs = jnp.exp(freq_idx * neg_scale)                            # (1, dim)
    emb = t * freqs                                                  # (tile_b, dim)
    out = jnp.where(is_cos, jnp.cos(emb), jnp.sin(emb))              # exact sin/cos halves
    out_ref[...] = out.astype(out_ref.dtype)


def sinusoidal_position_embeddings(time: jax.Array, dim: int, *,
                                   out_dtype=jnp.float32,
                                   target_block_bytes: int = 4 << 20) -> jax.Array:
    """time: (B,) float array. Returns (B, dim) embeddings (dtype=out_dtype)."""
    assert dim % 2 == 0 and dim >= 4, "dim must be even and >= 4 (half_dim-1 > 0)"
    half_dim = dim // 2
    b = time.shape[0]

    # Parameter-free module: scale derived exactly as in the PyTorch forward.
    neg_scale = -(math.log(10000.0) / (half_dim - 1))
    out_itemsize = jnp.dtype(out_dtype).itemsize

    # Batch tiling: multi-MiB output blocks to amortize per-step overhead...
    tile_b = max(512, target_block_bytes // (out_itemsize * dim))
    tile_b = _round_up(tile_b, 8)
    # ...but keep >=2 grid tiles for non-tiny batches so "parallel" can shard
    # the grid across both v7x TensorCores.
    if b >= 16:
        tile_b = min(tile_b, _round_up(pl.cdiv(b, 2), 8))
    tile_b = min(tile_b, _round_up(b, 8))
    n_tiles = pl.cdiv(b, tile_b)
    b_padded = n_tiles * tile_b

    # Pad only the tiny (B,1) time column (padding rows are benign: their
    # output rows fall outside out_shape and are dropped on writeback).
    time_2d = time.astype(jnp.float32).reshape(b, 1)
    if b_padded != b:
        time_2d = jnp.pad(time_2d, ((0, b_padded - b), (0, 0)))

    # Moderate B: load the whole time column once (constant index_map) instead
    # of a lane-sparse per-step (tile_b,1) DMA.
    full_column = b_padded <= 16384
    if full_column:
        in_spec = pl.BlockSpec((b_padded, 1), lambda i: (0, 0))
        time_vmem_bytes = b_padded * 128 * 4 * 2      # lane-padded, 2 buffers
    else:
        in_spec = pl.BlockSpec((tile_b, 1), lambda i: (i, 0))
        time_vmem_bytes = tile_b * 128 * 4 * 2

    out_block_bytes = tile_b * dim * out_itemsize
    vmem_limit = int(min(100 << 20,
                         max(32 << 20,
                             2 * out_block_bytes + time_vmem_bytes + (4 << 20))))

    kernel = functools.partial(_sinusoidal_kernel, half_dim=half_dim,
                               neg_scale=neg_scale, tile_b=tile_b,
                               full_column=full_column)

    return pl.pallas_call(
        kernel,
        out_shape=jax.ShapeDtypeStruct((b, dim), out_dtype),
        grid=(n_tiles,),
        in_specs=[in_spec],
        out_specs=pl.BlockSpec((tile_b, dim), lambda i: (i, 0)),
        compiler_params=pltpu.CompilerParams(
            dimension_semantics=("parallel",),
            vmem_limit_bytes=vmem_limit),
    )(time_2d)
    # TODO(synk): for small production batches (one grid step), fuse this
    # sin/cos generation into the consumer time-MLP kernel instead of a
    # standalone pallas_call.


def _reference(time: jax.Array, dim: int) -> jax.Array:
    half_dim = dim // 2
    scale = math.log(10000.0) / (half_dim - 1)
    freqs = jnp.exp(jnp.arange(half_dim, dtype=jnp.float32) * -scale)
    emb = time.astype(jnp.float32)[:, None] * freqs[None, :]
    return jnp.concatenate([jnp.sin(emb), jnp.cos(emb)], axis=-1)


if __name__ == "__main__":
    key = jax.random.PRNGKey(0)
    B, DIM = 8, 32  # small shapes: batch of 8 timesteps, embedding dim 32

    # Deterministic "time" input (e.g. diffusion timesteps as floats).
    time = jax.random.uniform(key, (B,), dtype=jnp.float32,
                              minval=0.0, maxval=1000.0)

    out = jax.block_until_ready(sinusoidal_position_embeddings(time, DIM))

    ref = _reference(time, DIM)
    assert out.shape == (B, DIM) and out.dtype == jnp.float32
    # f32 sin/cos at arguments up to ~1e3: allow ulp-level exp/sin differences
    # between the Mosaic EUP and the XLA reference lowering.
    assert jnp.allclose(out, ref, atol=1e-4, rtol=1e-4), "mismatch vs reference"

    print("KERNEL_OK")
</pallas_src>

<mosaic_0001>
module attributes {stable_mosaic.version = 11 : i64} {
  func.func @_sinusoidal_kernel(%arg0: i32, %arg1: memref<8x1xf32, #tpu.memory_space<vmem>>, %arg2: memref<8x32xf32, #tpu.memory_space<vmem>>) attributes {dimension_semantics = [#tpu.dimension_semantics<parallel>], iteration_bounds = array<i64: 1>, scalar_prefetch = 0 : i64, scratch_operands = 0 : i64, tpu.core_type = #tpu.core_type<tc>, window_params = [{pipeline_mode = #tpu.pipeline_mode<synchronous>, transform_indices = @transform_0, window_bounds = array<i64: 8, 1>}, {transform_indices = @transform_1, window_bounds = array<i64: 8, 32>}]} {
    %c8_i32 = arith.constant 8 : i32
    %0 = arith.muli %arg0, %c8_i32 : i32
    %1 = tpu.assume_multiple %0, 8 : i32
    %2 = arith.index_cast %1 : i32 to index
    %c0 = arith.constant 0 : index
    %3 = vector.load %arg1[%2, %c0] : memref<8x1xf32, #tpu.memory_space<vmem>>, vector<8x1xf32>
    %4 = tpu.iota {dimensions = array<i32: 1>} : vector<1x32xi32>
    %c16_i32 = arith.constant 16 : i32
    %5 = vector.broadcast %c16_i32 : i32 to vector<1x32xi32>
    %6 = arith.cmpi sge, %4, %5 : vector<1x32xi32>
    %c16_i32_0 = arith.constant 16 : i32
    %c0_i32 = arith.constant 0 : i32
    %7 = vector.broadcast %c16_i32_0 : i32 to vector<1x32xi32>
    %8 = vector.broadcast %c0_i32 : i32 to vector<1x32xi32>
    %9 = arith.select %6, %7, %8 : vector<1x32xi1>, vector<1x32xi32>
    %10 = arith.subi %4, %9 : vector<1x32xi32>
    %11 = arith.sitofp %10 : vector<1x32xi32> to vector<1x32xf32>
    %cst = arith.constant -0.614022672 : f32
    %12 = vector.broadcast %cst : f32 to vector<1x32xf32>
    %13 = arith.mulf %11, %12 : vector<1x32xf32>
    %14 = math.exp %13 : vector<1x32xf32>
    %15 = vector.broadcast %3 : vector<8x1xf32> to vector<8x32xf32>
    %16 = vector.broadcast %14 : vector<1x32xf32> to vector<8x32xf32>
    %17 = arith.mulf %15, %16 : vector<8x32xf32>
    %18 = math.cos %17 : vector<8x32xf32>
    %19 = math.sin %17 : vector<8x32xf32>
    %20 = vector.shape_cast %6 : vector<1x32xi1> to vector<1x32xi1>
    %21 = vector.broadcast %20 : vector<1x32xi1> to vector<8x32xi1>
    %22 = arith.select %21, %18, %19 : vector<8x32xi1>, vector<8x32xf32>
    %c0_1 = arith.constant 0 : index
    %c0_2 = arith.constant 0 : index
    %23 = vector.load %arg2[%c0_1, %c0_2] : memref<8x32xf32, #tpu.memory_space<vmem>>, vector<8x32xf32>
    tpu.vector_store %arg2[%c0_1, %c0_2], %22 {strides = array<i32>} : memref<8x32xf32, #tpu.memory_space<vmem>>, vector<8x32xf32>,
    return
  }
  func.func @transform_0(%arg0: i32) -> (i32, i32) {
    %c0_i32 = arith.constant 0 : i32
    %c0_i32_0 = arith.constant 0 : i32
    %c0_i32_1 = arith.constant 0 : i32
    return %c0_i32, %c0_i32_0 : i32, i32
  }
  func.func @transform_1(%arg0: i32) -> (i32, i32) {
    %c0_i32 = arith.constant 0 : i32
    %c0_i32_0 = arith.constant 0 : i32
    return %arg0, %c0_i32 : i32, i32
  }
}

</mosaic_0001>

<llo_original>
// kernel: tpu_custom_call.1
$region0: #{tpu_custom_call.1}
  #allocation0 [shape = 'u32[]', space=smem, size = 0x4, offset = 0x4, fixed_abs, tag = 'smem constant byte address 0x4 - core index']
  #allocation1 [shape = 'u32[144,128]{1,0:T(1,128)}', space=vmem, size = 0x12000, scoped, tag = 'internal scratch']
  %s0 = inlined_call_operand.vmem [shape: f32[8,1], index: 0, kind: input, shape index: {}]
  %s1 = inlined_call_operand.hbm [shape: f32[8,32], index: 1, kind: output, shape index: {}]
  %s2 = sld [smem:[#allocation0]]
  $region14: #{tpu_custom_call.1} parent=0
    _
  %s4 = ssub.s32 1, %s2
  %s5 = scalar_select 0, %s4, %s2
  $region1: #{tpu_custom_call.1} parent=0
    #allocation2 [shape = 'u8[4096]{0}', space=vmem, size = 0x1000, scoped, tag = 'output window, operand 0, single buffered']
    #allocation3 [shape = 's32[1]{0}', space=sflag, size = 0x4, scoped, tag = 'scoped memory for tpu_custom_call.1']
    %6 = vsyncpa [#allocation3], 0
    // Predicated region
    $region2: #{tpu_custom_call.1} parent=1 // pred_check
      _
    $region3: #{tpu_custom_call.1} parent=1 // pred_check_branch
      %8 = sbr.rel (0) target = $region5
    $region4: #{tpu_custom_call.1} parent=1 // pred_region
      _
    $region5: #{tpu_custom_call.1} parent=1 // pred_fallthru
      _
    %s9 = smul.u32 0, 8
    %s10 = scalar_lea.vmem %s0, %s9
    %v11 = vld [vmem:[%s10] sm:$0xff]
    %v12 = vlaneseq
    %v13 = vand.u32 %v12, 127
    %vm14 = vcmp.ge.s32.totalorder %v13, 16
    %v15 = vsel %vm14, 16, 0
    %v16 = vsub.s32 %v13, %v15
    %v17 = vcvt.s32.f32 %v16
    %v18 = vmul.f32 %v17, -0.6140227
    %v19 = vmul.f32 %v18, 1.442695
    %v20 = vpow.pop %v19
    %22 = vset.pattern.permute.xlu0 0
    %23 = vperm.xlu0 %22, %v11
    %v24 = vpop.permute.xlu0 %23
    %v26 = vmul.f32 %v24, %v20
    %v27 = vand.u32 2147483647, %v26
    %vm28 = vcmp.le.f32.partialorder %v27, 0.7853982
    %vm29 = vcmp.lt.s32.totalorder %v26, 0
    %v30 = vand.u32 %v26, 2139095040
    %v31 = vshrl.u32 %v30, 23
    %v32 = vsub.s32 %v31, 127
    %v33 = vand.u32 2147483647, %v26
    %v34 = vand.u32 %v33, 8388607
    %v35 = vor.u32 %v34, 8388608
    %v36 = vsub.s32 0, %v35
    %v37 = vadd.s32 %v32, 1
    %vm38 = vcmp.gt.s32.totalorder %v37, 0
    %v39 = vsel %vm38, %v37, 0
    %v40 = vshrl.u32 %v39, 5
    %v41 = vand.u32 %v39, 31
    %v42 = vsub.s32 32, %v41
    %v43 = vshrl.u32 683565275, %v42
    %v44 = vshll.u32 683565275, %v41
    %v45 = vshrl.u32 2475754826, %v42
    %v46 = vor.u32 %v44, %v45
    %v47 = vshll.u32 2475754826, %v41
    %v48 = vshrl.u32 2131351028, %v42
    %v49 = vor.u32 %v47, %v48
    %v50 = vshll.u32 2131351028, %v41
    %v51 = vshrl.u32 2102212464, %v42
    %v52 = vor.u32 %v50, %v51
    %v53 = vshll.u32 2102212464, %v41
    %v54 = vshrl.u32 920167782, %v42
    %v55 = vor.u32 %v53, %v54
    %v56 = vshll.u32 920167782, %v41
    %v57 = vshrl.u32 1326507024, %v42
    %v58 = vor.u32 %v56, %v57
    %vm59 = vcmp.lt.s32.totalorder %v40, 1
    %vm60 = vcmp.lt.s32.totalorder %v40, 2
    %vm61 = vcmp.lt.s32.totalorder %v40, 3
    %vm62 = vcmp.lt.s32.totalorder %v40, 4
    %v63 = vsel %vm59, %v43, %v46
    %v64 = vsel %vm62, %v52, 2102212464
    %v65 = vsel %vm61, %v49, %v64
    %v66 = vsel %vm60, %v63, %v65
    %v67 = vsel %vm59, %v46, %v49
    %v68 = vsel %vm62, %v55, 920167782
    %v69 = vsel %vm61, %v52, %v68
    %v70 = vsel %vm60, %v67, %v69
    %v71 = vsel %vm59, %v49, %v52
    %v72 = vsel %vm62, %v58, 1326507024
    %v73 = vsel %vm61, %v55, %v72
    %v74 = vsel %vm60, %v71, %v73
    %v75 = vshll.u32 %v35, 8
    %v76 = vmul.u32.u64.compose %v75, %v74
    %v77 = vextract.low.u32 %v76
    %v78 = vextract.high.u32 %v76
    %v79 = vmul.u32.u64.compose %v75, %v70
    %v80 = vextract.low.u32 %v79
    %v81 = vextract.high.u32 %v79
    %v82 = vmul.u32 %v75, %v66
    %v83 = vadd.s32 %v78, %v80
    %vm84 = vc.u32 %v78, %v80
    %v85 = vadd.s32 %v81, 1
    %v86 = vsel %vm84, %v85, %v81
    %v87 = vadd.s32 %v82, %v86
    %v88 = vadd.s32 %v87, 536870912
    %v89 = vshrl.u32 %v88, 30
    %v90 = vshll.u32 %v89, 30
    %v91 = vsub.s32 %v87, %v90
    %vm92 = vcmp.lt.s32.totalorder %v91, 0
    %v93 = vsub.s32 0, %v91
    %v94 = vsel %vm92, %v93, %v91
    %v95 = vclz %v94
    %v96 = vsub.s32 %v95, 2
    %vm97 = vcmp.gt.s32.totalorder 0, %v96
    %v98 = vsel %vm97, 0, %v96
    %v99 = vsub.s32 32, %v98
    %v100 = vshll.u32 %v91, %v98
    %v101 = vshrl.u32 %v83, %v99
    %v102 = vor.u32 %v100, %v101
    %v103 = vsub.s32 4294967266, %v98
    %v104 = vadd.s32 %v103, 127
    %v105 = vshll.u32 %v104, 23
    %v106 = vor.u32 4788187, %v105
    %v107 = vand.u32 2147483647, %v106
    %v109 = vcvt.s32.f32 %v102
    %v110 = vmul.f32 %v109, %v107
    %v111 = vxor.u32 %v110, 2147483648
    %v112 = vsel %vm29, %v111, %v110
    %v113 = vsub.s32 4, %v89
    %v114 = vsel %vm29, %v113, %v89
    %v115 = vsel %vm28, %v26, %v112
    %v116 = vsel %vm28, 0, %v114
    %v117 = vcosq.f32.pop %v115
    %v118 = vsinq.f32.pop %v115
    %vm119 = vweird.f32 %v26
    %v120 = vand.u32 %v116, 3
    %vm121 = vcmp.lt.s32.totalorder %v120, 2
    %vm122 = vcmp.eq.s32.totalorder %v120, 0
    %v123 = vxor.u32 %v118, 2147483648
    %v124 = vsel %vm122, %v117, %v123
    %vm125 = vcmp.eq.s32.totalorder %v120, 2
    %v126 = vxor.u32 %v117, 2147483648
    %v127 = vsel %vm125, %v126, %v118
    %v128 = vsel %vm121, %v124, %v127
    %v129 = vsel %vm119, nan, %v128
    %v130 = vand.u32 2147483647, %v26
    %vm131 = vcmp.le.f32.partialorder %v130, 0.7853982
    %vm132 = vcmp.lt.s32.totalorder %v26, 0
    %v133 = vand.u32 %v26, 2139095040
    %v134 = vshrl.u32 %v133, 23
    %v135 = vsub.s32 %v134, 127
    %v136 = vand.u32 2147483647, %v26
    %v137 = vand.u32 %v136, 8388607
    %v138 = vor.u32 %v137, 8388608
    %v139 = vsub.s32 0, %v138
    %v140 = vadd.s32 %v135, 1
    %vm141 = vcmp.gt.s32.totalorder %v140, 0
    %v142 = vsel %vm141, %v140, 0
    %v143 = vshrl.u32 %v142, 5
    %v144 = vand.u32 %v142, 31
    %v145 = vsub.s32 32, %v144
    %v146 = vshrl.u32 683565275, %v145
    %v147 = vshll.u32 683565275, %v144
    %v148 = vshrl.u32 2475754826, %v145
    %v149 = vor.u32 %v147, %v148
    %v150 = vshll.u32 2475754826, %v144
    %v151 = vshrl.u32 2131351028, %v145
    %v152 = vor.u32 %v150, %v151
    %v153 = vshll.u32 2131351028, %v144
    %v154 = vshrl.u32 2102212464, %v145
    %v155 = vor.u32 %v153, %v154
    %v156 = vshll.u32 2102212464, %v144
    %v157 = vshrl.u32 920167782, %v145
    %v158 = vor.u32 %v156, %v157
    %v159 = vshll.u32 920167782, %v144
    %v160 = vshrl.u32 1326507024, %v145
    %v161 = vor.u32 %v159, %v160
    %vm162 = vcmp.lt.s32.totalorder %v143, 1
    %vm163 = vcmp.lt.s32.totalorder %v143, 2
    %vm164 = vcmp.lt.s32.totalorder %v143, 3
    %vm165 = vcmp.lt.s32.totalorder %v143, 4
    %v166 = vsel %vm162, %v146, %v149
    %v167 = vsel %vm165, %v155, 2102212464
    %v168 = vsel %vm164, %v152, %v167
    %v169 = vsel %vm163, %v166, %v168
    %v170 = vsel %vm162, %v149, %v152
    %v171 = vsel %vm165, %v158, 920167782
    %v172 = vsel %vm164, %v155, %v171
    %v173 = vsel %vm163, %v170, %v172
    %v174 = vsel %vm162, %v152, %v155
    %v175 = vsel %vm165, %v161, 1326507024
    %v176 = vsel %vm164, %v158, %v175
    %v177 = vsel %vm163, %v174, %v176
    %v178 = vshll.u32 %v138, 8
    %v179 = vmul.u32.u64.compose %v178, %v177
    %v180 = vextract.low.u32 %v179
    %v181 = vextract.high.u32 %v179
    %v182 = vmul.u32.u64.compose %v178, %v173
    %v183 = vextract.low.u32 %v182
    %v184 = vextract.high.u32 %v182
    %v185 = vmul.u32 %v178, %v169
    %v186 = vadd.s32 %v181, %v183
    %vm187 = vc.u32 %v181, %v183
    %v188 = vadd.s32 %v184, 1
    %v189 = vsel %vm187, %v188, %v184
    %v190 = vadd.s32 %v185, %v189
    %v191 = vadd.s32 %v190, 536870912
    %v192 = vshrl.u32 %v191, 30
    %v193 = vshll.u32 %v192, 30
    %v194 = vsub.s32 %v190, %v193
    %vm195 = vcmp.lt.s32.totalorder %v194, 0
    %v196 = vsub.s32 0, %v194
    %v197 = vsel %vm195, %v196, %v194
    %v198 = vclz %v197
    %v199 = vsub.s32 %v198, 2
    %vm200 = vcmp.gt.s32.totalorder 0, %v199
    %v201 = vsel %vm200, 0, %v199
    %v202 = vsub.s32 32, %v201
    %v203 = vshll.u32 %v194, %v201
    %v204 = vshrl.u32 %v186, %v202
    %v205 = vor.u32 %v203, %v204
    %v206 = vsub.s32 4294967266, %v201
    %v207 = vadd.s32 %v206, 127
    %v208 = vshll.u32 %v207, 23
    %v209 = vor.u32 4788187, %v208
    %v210 = vand.u32 2147483647, %v209
    %v212 = vcvt.s32.f32 %v205
    %v213 = vmul.f32 %v212, %v210
    %v214 = vxor.u32 %v213, 2147483648
    %v215 = vsel %vm132, %v214, %v213
    %v216 = vsub.s32 4, %v192
    %v217 = vsel %vm132, %v216, %v192
    %v218 = vsel %vm131, %v26, %v215
    %v219 = vsel %vm131, 0, %v217
    %v220 = vcosq.f32.pop %v218
    %v221 = vsinq.f32.pop %v218
    %vm222 = vweird.f32 %v26
    %v223 = vadd.s32 %v219, 3
    %v224 = vand.u32 %v223, 3
    %vm225 = vcmp.lt.s32.totalorder %v224, 2
    %vm226 = vcmp.eq.s32.totalorder %v224, 0
    %v227 = vxor.u32 %v221, 2147483648
    %v228 = vsel %vm226, %v220, %v227
    %vm229 = vcmp.eq.s32.totalorder %v224, 2
    %v230 = vxor.u32 %v220, 2147483648
    %v231 = vsel %vm229, %v230, %v221
    %v232 = vsel %vm225, %v228, %v231
    %v233 = vsel %vm222, nan, %v232
    %v234 = vsel %vm14, 1, 0
    %vm235 = vcmp.eq.s32.totalorder %v234, 1
    %v236 = vsel %vm235, %v129, %v233
    %vm237 = vcmask 261120
    %238 = vst.msk [vmem:[#allocation2] sm:$0xff] %vm237, %v236
    // Predicated region
    $region6: #{tpu_custom_call.1} parent=1 // pred_check
      _
    $region7: #{tpu_custom_call.1} parent=1 // pred_check_branch
      %240 = sbr.rel (0) target = $region9
    $region8: #{tpu_custom_call.1} parent=1 // pred_region
      %s242 = ssub.s32 128, 128
      %243 = vsyncadd [#allocation3], %s242
      %s245 = sshll.u32 [#allocation2], 4
      %s246 = int_to_ptr.vmem [resolvable:$true] %s245
      %248 = dma.vmem_to_hbm [thread:$0]  %s246, 128, %s1, [#allocation3]
    $region9: #{tpu_custom_call.1} parent=1 // pred_fallthru
      _
    // Predicated region
    $region10: #{tpu_custom_call.1} parent=1 // pred_check
      _
    $region11: #{tpu_custom_call.1} parent=1 // pred_check_branch
      %250 = sbr.rel (0) target = $region13
    $region12: #{tpu_custom_call.1} parent=1 // pred_region
      %251 = dma.done [#allocation3], 128
    $region13: #{tpu_custom_call.1} parent=1 // pred_fallthru
      _
    %252 = vsyncpa [#allocation3], 1

</llo_original>
